<compile_context>
chip_gen: v7x
topology: tpu7x:2x2x1
jax: 0.10.0
libtpu: 0.0.40
codegen_flags: <defaults>
</compile_context>

<pallas_src>
import jax
import jax.numpy as jnp
from jax.experimental import pallas as pl
from jax.experimental.pallas import tpu as pltpu


def gating_kernel(x_ref, w_ref, b_ref, o_ref):
    # (TB, K) bf16 @ (K, E_pad) bf16 on the MXU, f32 accumulation.
    logits = jnp.dot(
        x_ref[...], w_ref[...], preferred_element_type=jnp.float32
    ) + b_ref[...]
    # Numerically stable softmax in f32.  Padded lanes carry -1e30 logits, so
    # the real row max is unaffected and their exp underflows to exactly 0.
    m = jnp.max(logits, axis=-1, keepdims=True)
    e = jnp.exp(logits - m)
    denom = jnp.sum(e, axis=-1, keepdims=True)
    o_ref[...] = (e / denom).astype(o_ref.dtype)   # exact normalization


def _round_up(n, m):
    return ((n + m - 1) // m) * m


def _resident_spec(block_shape):
    """BlockSpec pinned at block (0, 0) for all grid steps (stays in VMEM).

    Requests a single buffer (never refilled); falls back to the default
    double-buffered spec on JAX versions without pipeline_mode.
    """
    index_map = lambda i: (0,) * len(block_shape)
    if hasattr(pl, "Buffered"):
        try:
            return pl.BlockSpec(block_shape, index_map,
                                pipeline_mode=pl.Buffered(1))
        except TypeError:
            pass
    return pl.BlockSpec(block_shape, index_map)


def _choose_tile_b(B, K, E_pad, in_dsize, budget_bytes=48 * 1024 * 1024):
    """Pick the batch tile so double-buffered tiles fit a ~48 MiB VMEM budget."""
    # Conservative cost model (counts the weight twice in case the
    # single-buffer request is unavailable):
    #   weight: 2 * K * E_pad * in_dsize      (resident)
    #   bias:   2 * E_pad * 4                  (resident, tiny)
    #   x:      2 * TB * K * in_dsize          (double-buffered)
    #   out:    2 * TB * E_pad * 4             (double-buffered, f32)
    fixed = 2 * K * E_pad * in_dsize + 2 * E_pad * 4
    per_row = 2 * K * in_dsize + 2 * E_pad * 4
    avail = budget_bytes - fixed
    if avail < per_row * 8:
        # TODO(synk): tile K with an f32 accumulator for extremely large
        # input_dim where the resident weight alone nearly fills VMEM.
        tb_max = 8
    else:
        tb_max = max(8, (avail // per_row) // 8 * 8)
    # Bigger tiles amortize the ~0.35 us per-grid-step overhead when each
    # row is cheap; cap at 512 for fat rows.
    tb_cap = 1024 if K * in_dsize <= 8 * 1024 else 512
    # >= 2 grid steps whenever B allows it, so the "parallel" batch axis can
    # be sharded across v7x's 2 TensorCores.  Sublane (8) aligned.
    half_b = _round_up(max(1, -(-B // 2)), 8)
    tb = min(tb_cap, tb_max, max(8, half_b))
    tb = max(8, min(tb, _round_up(B, 8)))
    return int(tb)


def prepare_gating_params(weight, bias, *, compute_dtype=jnp.bfloat16):
    """One-time (model-init) prep: transpose + lane-pad the nn.Linear params.

    weight: (num_experts, input_dim)  -- PyTorch nn.Linear layout
    bias:   (num_experts,)
    Returns (w_t, b_pad) with the expert axis padded to a multiple of 128.
    """
    E, K = weight.shape
    E_pad = _round_up(max(E, 128), 128)
    w_t = jnp.zeros((K, E_pad), compute_dtype).at[:, :E].set(
        weight.T.astype(compute_dtype))
    b_pad = jnp.full((1, E_pad), -1e30, jnp.float32).at[0, :E].set(
        bias.astype(jnp.float32))
    return w_t, b_pad


def gating_network_apply(x, w_t, b_pad, num_experts, *, trim=True):
    """softmax(x @ weight.T + bias, axis=-1) with pre-prepared params."""
    B, K = x.shape
    E_pad = w_t.shape[1]
    x_c = x.astype(w_t.dtype)          # bf16 matmul inputs (f32 accumulate)
    in_dsize = jnp.dtype(w_t.dtype).itemsize

    tb = _choose_tile_b(B, K, E_pad, in_dsize)
    n_tiles = pl.cdiv(B, tb)           # ragged last block: writes are masked

    out = pl.pallas_call(
        gating_kernel,
        out_shape=jax.ShapeDtypeStruct((B, E_pad), jnp.float32),
        grid_spec=pltpu.PrefetchScalarGridSpec(
            num_scalar_prefetch=0,
            grid=(n_tiles,),
            in_specs=[
                pl.BlockSpec((tb, K), lambda i: (i, 0)),   # batch-tiled x
                _resident_spec((K, E_pad)),                # resident weight
                _resident_spec((1, E_pad)),                # resident bias
            ],
            out_specs=pl.BlockSpec((tb, E_pad), lambda i: (i, 0)),
        ),
        compiler_params=pltpu.CompilerParams(
            dimension_semantics=("parallel",),
            vmem_limit_bytes=56 * 1024 * 1024,
        ),
    )(x_c, w_t, b_pad)

    if trim:
        return out[:, :num_experts]
    # Padded lanes [:, num_experts:] are exactly 0 after softmax, so
    # downstream top-k / weighted-sum consumers can read this directly and
    # skip the slice copy.
    return out


def gating_network(x, weight, bias, *, compute_dtype=jnp.bfloat16, trim=True):
    """One-shot convenience wrapper (prep + apply)."""
    w_t, b_pad = prepare_gating_params(weight, bias, compute_dtype=compute_dtype)
    return gating_network_apply(x, w_t, b_pad, weight.shape[0], trim=trim)


if __name__ == "__main__":
    key = jax.random.PRNGKey(0)
    k_x, k_w, k_b = jax.random.split(key, 3)

    batch = 8
    input_dim = 32
    num_experts = 8

    x = jax.random.normal(k_x, (batch, input_dim), dtype=jnp.float32)
    # Deterministic synthetic parameters (nn.Linear(input_dim, num_experts)).
    bound = 1.0 / (input_dim ** 0.5)
    weight = jax.random.uniform(
        k_w, (num_experts, input_dim), minval=-bound, maxval=bound,
        dtype=jnp.float32)
    bias = jax.random.uniform(
        k_b, (num_experts,), minval=-bound, maxval=bound, dtype=jnp.float32)

    # Hoisted param prep (done once at "model init"), then the kernel call.
    w_t, b_pad = prepare_gating_params(weight, bias)
    out = gating_network_apply(x, w_t, b_pad, num_experts)
    out = jax.block_until_ready(out)

    # Correctness vs plain JAX reference.  bf16 matmul inputs (f32 accumulate
    # + f32 softmax) -> ~1e-2 absolute tolerance on the probabilities.
    ref = jax.nn.softmax(x @ weight.T + bias, axis=-1)
    assert out.shape == (batch, num_experts)
    assert jnp.allclose(out, ref, atol=2e-2, rtol=2e-2)
    # Exact (non-approx) normalization: rows sum to 1 to f32 rounding.
    assert jnp.allclose(jnp.sum(out, axis=-1), 1.0, atol=1e-5)

    print("KERNEL_OK")
</pallas_src>

<mosaic_0001>
module attributes {stable_mosaic.version = 11 : i64} {
  func.func @gating_kernel(%arg0: i32, %arg1: memref<8x32xbf16, #tpu.memory_space<vmem>>, %arg2: memref<32x128xbf16, #tpu.memory_space<vmem>>, %arg3: memref<1x128xf32, #tpu.memory_space<vmem>>, %arg4: memref<8x128xf32, #tpu.memory_space<vmem>>) attributes {dimension_semantics = [#tpu.dimension_semantics<parallel>], iteration_bounds = array<i64: 1>, scalar_prefetch = 0 : i64, scratch_operands = 0 : i64, tpu.core_type = #tpu.core_type<tc>, window_params = [{transform_indices = @transform_0, window_bounds = array<i64: 8, 32>}, {pipeline_mode = #tpu.pipeline_mode<synchronous>, transform_indices = @transform_1, window_bounds = array<i64: 32, 128>}, {pipeline_mode = #tpu.pipeline_mode<synchronous>, transform_indices = @transform_2, window_bounds = array<i64: 1, 128>}, {transform_indices = @transform_3, window_bounds = array<i64: 8, 128>}]} {
    %c0 = arith.constant 0 : index
    %c0_0 = arith.constant 0 : index
    %0 = vector.load %arg1[%c0, %c0_0] : memref<8x32xbf16, #tpu.memory_space<vmem>>, vector<8x32xbf16>
    %c0_1 = arith.constant 0 : index
    %c0_2 = arith.constant 0 : index
    %1 = vector.load %arg2[%c0_1, %c0_2] : memref<32x128xbf16, #tpu.memory_space<vmem>>, vector<32x128xbf16>
    %cst = arith.constant dense<0.000000e+00> : vector<8x128xf32>
    %2 = tpu.matmul %0, %1, %cst {dimension_numbers = #tpu.dot_dimension_numbers<[1], [0], [0], [1], [0, 0, 1, 1], [], []>} : vector<8x32xbf16>, vector<32x128xbf16>, vector<8x128xf32> -> vector<8x128xf32>
    %c0_3 = arith.constant 0 : index
    %c0_4 = arith.constant 0 : index
    %3 = vector.load %arg3[%c0_3, %c0_4] : memref<1x128xf32, #tpu.memory_space<vmem>>, vector<1x128xf32>
    %4 = vector.broadcast %3 : vector<1x128xf32> to vector<8x128xf32>
    %5 = arith.addf %2, %4 : vector<8x128xf32>
    %cst_5 = arith.constant dense<0xFF800000> : vector<8xf32>
    %6 = vector.multi_reduction <maximumf>, %5, %cst_5 [1] : vector<8x128xf32> to vector<8xf32>
    %7 = vector.shape_cast %6 : vector<8xf32> to vector<8x1xf32>
    %8 = vector.broadcast %7 : vector<8x1xf32> to vector<8x128xf32>
    %9 = arith.subf %5, %8 : vector<8x128xf32>
    %10 = math.exp %9 : vector<8x128xf32>
    %cst_6 = arith.constant dense<0.000000e+00> : vector<8xf32>
    %11 = vector.multi_reduction <add>, %10, %cst_6 [1] : vector<8x128xf32> to vector<8xf32>
    %12 = vector.shape_cast %11 : vector<8xf32> to vector<8x1xf32>
    %13 = vector.broadcast %12 : vector<8x1xf32> to vector<8x128xf32>
    %14 = arith.divf %10, %13 : vector<8x128xf32>
    %c0_7 = arith.constant 0 : index
    %c0_8 = arith.constant 0 : index
    %15 = vector.load %arg4[%c0_7, %c0_8] : memref<8x128xf32, #tpu.memory_space<vmem>>, vector<8x128xf32>
    tpu.vector_store %arg4[%c0_7, %c0_8], %14 {strides = array<i32>} : memref<8x128xf32, #tpu.memory_space<vmem>>, vector<8x128xf32>,
    return
  }
  func.func @transform_0(%arg0: i32) -> (i32, i32) {
    %c0_i32 = arith.constant 0 : i32
    %c0_i32_0 = arith.constant 0 : i32
    return %arg0, %c0_i32 : i32, i32
  }
  func.func @transform_1(%arg0: i32) -> (i32, i32) {
    %c0_i32 = arith.constant 0 : i32
    %c0_i32_0 = arith.constant 0 : i32
    %c0_i32_1 = arith.constant 0 : i32
    return %c0_i32, %c0_i32_0 : i32, i32
  }
  func.func @transform_2(%arg0: i32) -> (i32, i32) {
    %c0_i32 = arith.constant 0 : i32
    %c0_i32_0 = arith.constant 0 : i32
    %c0_i32_1 = arith.constant 0 : i32
    return %c0_i32, %c0_i32_0 : i32, i32
  }
  func.func @transform_3(%arg0: i32) -> (i32, i32) {
    %c0_i32 = arith.constant 0 : i32
    %c0_i32_0 = arith.constant 0 : i32
    return %arg0, %c0_i32 : i32, i32
  }
}

</mosaic_0001>

<llo_original>
// kernel: tpu_custom_call.1
$region0: #{tpu_custom_call.1}
  #allocation0 [shape = 'u32[]', space=smem, size = 0x4, offset = 0x4, fixed_abs, tag = 'smem constant byte address 0x4 - core index']
  #allocation1 [shape = 'u32[144,128]{1,0:T(1,128)}', space=vmem, size = 0x12000, scoped, tag = 'internal scratch']
  %s0 = inlined_call_operand.hbm [shape: bf16[8,32], index: 0, kind: input, shape index: {}]
  %s1 = inlined_call_operand.hbm [shape: bf16[32,128], index: 1, kind: input, shape index: {}]
  %s2 = inlined_call_operand.vmem [shape: f32[1,128], index: 2, kind: input, shape index: {}]
  %s3 = inlined_call_operand.hbm [shape: f32[8,128], index: 3, kind: output, shape index: {}]
  %s4 = sld [smem:[#allocation0]]
  $region30: #{tpu_custom_call.1} parent=0
    _
  %s6 = ssub.s32 1, %s4
  %s7 = scalar_select 0, %s6, %s4
  $region1: #{tpu_custom_call.1} parent=0
    #allocation2 [shape = 'u8[2048]{0}', space=vmem, size = 0x800, scoped, tag = 'input window, operand 0, single buffered']
    #allocation3 [shape = 's32[1]{0}', space=sflag, size = 0x4, scoped, tag = 'scoped memory for tpu_custom_call.1']
    #allocation4 [shape = 's32[1]{0}', space=sflag, size = 0x4, scoped, tag = 'scoped memory for tpu_custom_call.1']
    #allocation5 [shape = 'u8[8192]{0}', space=vmem, size = 0x2000, scoped, tag = 'input window, operand 1, single buffered']
    #allocation6 [shape = 's32[1]{0}', space=sflag, size = 0x4, scoped, tag = 'scoped memory for tpu_custom_call.1']
    #allocation7 [shape = 'u8[4096]{0}', space=vmem, size = 0x1000, scoped, tag = 'output window, operand 0, single buffered']
    %8 = vsyncpa [#allocation3], 0
    %9 = vsyncpa [#allocation6], 0
    %10 = vsyncpa [#allocation4], 0
    // Predicated region
    $region2: #{tpu_custom_call.1} parent=1 // pred_check
      _
    $region3: #{tpu_custom_call.1} parent=1 // pred_check_branch
      %12 = sbr.rel (0) target = $region5
    $region4: #{tpu_custom_call.1} parent=1 // pred_region
      %s14 = ssub.s32 64, 64
      %15 = vsyncadd [#allocation3], %s14
      %s17 = sshll.u32 [#allocation2], 4
      %s18 = int_to_ptr.vmem [resolvable:$true] %s17
      %20 = dma.hbm_to_vmem [thread:$0]  %s0, 64, %s18, [#allocation3]
    $region5: #{tpu_custom_call.1} parent=1 // pred_fallthru
      _
    // Predicated region
    $region6: #{tpu_custom_call.1} parent=1 // pred_check
      _
    $region7: #{tpu_custom_call.1} parent=1 // pred_check_branch
      %22 = sbr.rel (0) target = $region9
    $region8: #{tpu_custom_call.1} parent=1 // pred_region
      %s24 = ssub.s32 256, 256
      %25 = vsyncadd [#allocation6], %s24
      %s26 = sshll.u32 [#allocation5], 4
      %s27 = int_to_ptr.vmem [resolvable:$true] %s26
      %32 = dma.hbm_to_vmem [thread:$0]  %s1, 256, %s27, [#allocation6], 64, 64, 4
    $region9: #{tpu_custom_call.1} parent=1 // pred_fallthru
      _
    // Predicated region
    $region10: #{tpu_custom_call.1} parent=1 // pred_check
      _
    $region11: #{tpu_custom_call.1} parent=1 // pred_check_branch
      %34 = sbr.rel (0) target = $region13
    $region12: #{tpu_custom_call.1} parent=1 // pred_region
      _
    $region13: #{tpu_custom_call.1} parent=1 // pred_fallthru
      _
    // Predicated region
    $region14: #{tpu_custom_call.1} parent=1 // pred_check
      _
    $region15: #{tpu_custom_call.1} parent=1 // pred_check_branch
      %36 = sbr.rel (0) target = $region17
    $region16: #{tpu_custom_call.1} parent=1 // pred_region
      %37 = dma.done [#allocation3], 64
    $region17: #{tpu_custom_call.1} parent=1 // pred_fallthru
      _
    // Predicated region
    $region18: #{tpu_custom_call.1} parent=1 // pred_check
      _
    $region19: #{tpu_custom_call.1} parent=1 // pred_check_branch
      %39 = sbr.rel (0) target = $region21
    $region20: #{tpu_custom_call.1} parent=1 // pred_region
      %40 = dma.done [#allocation6], 256
    $region21: #{tpu_custom_call.1} parent=1 // pred_fallthru
      _
    %v42 = vld [vmem:[#allocation2] sm:$0xf]
    %v43 = vld [vmem:[#allocation5] sm:$0xf]
    %v44 = vld [vmem:[#allocation5 + $0x4] sm:$0xf]
    %v45 = vld [vmem:[#allocation5 + $0x8] sm:$0xf]
    %v46 = vld [vmem:[#allocation5 + $0xc] sm:$0xf]
    %v47 = vld [vmem:[%s2] sm:$0x1]
    %v49 = vlaneseq
    %v50 = vshrl.u32 %v49, 7
    %v51 = vsub.s32 0, %v50
    %v52 = vrot.slane %v47, %v51
    %v58 = vunpack.c.l.b16 %v43
    %v59 = vunpack.c.l.b16 %v44
    %v60 = vunpack.c.l.b16 %v45
    %v61 = vunpack.c.l.b16 %v46
    %v62 = vpack.c.b16 %v59, %v58
    %v63 = vpack.c.b16 %v61, %v60
    %vm66 = vcmask 261120
    %v68 = vsel %vm66, %v42, 0
    %70 = vmatprep.subr.bf16.mxu0 0
    %71 = vmatpush1.bf16.msra.mxu0 %v62
    %72 = vmatprep.subr.bf16.mxu0 0
    %73 = vmatpush1.bf16.msra.mxu0 %v63
    %74 = vmatprep.subr.bf16.mxu0 0
    %75 = vmatpush1.bf16.msra.mxu0 0
    %76 = vmatprep.subr.bf16.mxu0 0
    %77 = vmatpush1.bf16.msra.mxu0 0
    %78 = vmatprep.subr.bf16.mxu0 0
    %79 = vmatpush1.bf16.msra.mxu0 0
    %80 = vmatprep.subr.bf16.mxu0 0
    %81 = vmatpush1.bf16.msra.mxu0 0
    %82 = vmatprep.subr.bf16.mxu0 0
    %83 = vmatpush1.bf16.msra.mxu0 0
    %84 = vmatprep.subr.bf16.mxu0 0
    %85 = vmatpush1.bf16.msra.mxu0 0
    %86 = vmatprep.subr.bf16.mxu0 0
    %87 = vmatpush1.bf16.msra.mxu0 0
    %88 = vmatprep.subr.bf16.mxu0 0
    %89 = vmatpush1.bf16.msra.mxu0 0
    %90 = vmatprep.subr.bf16.mxu0 0
    %91 = vmatpush1.bf16.msra.mxu0 0
    %92 = vmatprep.subr.bf16.mxu0 0
    %93 = vmatpush1.bf16.msra.mxu0 0
    %94 = vmatprep.subr.bf16.mxu0 0
    %95 = vmatpush1.bf16.msra.mxu0 0
    %96 = vmatprep.subr.bf16.mxu0 0
    %97 = vmatpush1.bf16.msra.mxu0 0
    %98 = vmatprep.subr.bf16.mxu0 0
    %99 = vmatpush1.bf16.msra.mxu0 0
    %100 = vmatprep.subr.bf16.mxu0 0
    %101 = vmatpush1.bf16.msra.mxu0 0
    %102 = vmatprep.mubr.bf16.mxu0 0
    %103 = vmatmul.mubr.bf16.gmra.mrb[0].mxu0 %v68
    %v104 = vpop.f32.mrb[0].mxu0
    %v105 = vadd.f32 %v52, %v104
    %v106 = vpop.f32.mrb[0].mxu0
    %v107 = vpop.f32.mrb[0].mxu0
    %v108 = vpop.f32.mrb[0].mxu0
    %109 = vdwg.mxu0
    %110 = vmax.xlane.f32.xlu0 %v105
    %v111 = vpop.xlane.xlu0 %110
    %v112 = vsub.f32 %v105, %v111
    %v113 = vmul.f32 %v112, 1.442695
    %v114 = vpow.pop %v113
    %115 = vadd.xlane.f32.xlu0 %v114
    %v116 = vpop.xlane.xlu0 %115
    %v117 = vrcp.pop %v116
    %v118 = vmul.f32 %v114, %v117
    %119 = vst [vmem:[#allocation7] sm:$0xff] %v118
    // Predicated region
    $region22: #{tpu_custom_call.1} parent=1 // pred_check
      _
    $region23: #{tpu_custom_call.1} parent=1 // pred_check_branch
      %121 = sbr.rel (0) target = $region25
    $region24: #{tpu_custom_call.1} parent=1 // pred_region
      %s123 = ssub.s32 128, 128
      %124 = vsyncadd [#allocation4], %s123
      %s126 = sshll.u32 [#allocation7], 4
      %s127 = int_to_ptr.vmem [resolvable:$true] %s126
      %129 = dma.vmem_to_hbm [thread:$0]  %s127, 128, %s3, [#allocation4]
    $region25: #{tpu_custom_call.1} parent=1 // pred_fallthru
      _
    // Predicated region
    $region26: #{tpu_custom_call.1} parent=1 // pred_check
      _
    $region27: #{tpu_custom_call.1} parent=1 // pred_check_branch
      %131 = sbr.rel (0) target = $region29
    $region28: #{tpu_custom_call.1} parent=1 // pred_region
      %132 = dma.done [#allocation4], 128
    $region29: #{tpu_custom_call.1} parent=1 // pred_fallthru
      _
    %133 = vsyncpa [#allocation3], 1
    %134 = vsyncpa [#allocation6], 1
    %135 = vsyncpa [#allocation4], 1

</llo_original>
